<compile_context>
chip_gen: v6e
topology: v6e:2x2x1
jax: 0.10.0
libtpu: 0.0.40
codegen_flags: <defaults>
</compile_context>

<pallas_src>
import jax
import jax.numpy as jnp
from jax.experimental import pallas as pl
from jax.experimental.pallas import tpu as pltpu

IN_FEATURES = 4 * 4 * 128   # 2048
NUM_CLASSES = 10
PADDED_CLASSES = 128        # lane-dense output


def _resident_spec(shape):
    """BlockSpec for an operand that is identical for every grid step."""
    index_map = lambda i: (0,) * len(shape)
    try:
        # Constant index_map -> fetched exactly once; a single buffer avoids
        # wasting VMEM on a pipeline double-buffer that is never used.
        return pl.BlockSpec(shape, index_map, pipeline_mode=pl.Buffered(1))
    except TypeError:
        # Older API without pipeline_mode: fall back to the default (the
        # operand is still only DMA'd once thanks to the constant index_map).
        return pl.BlockSpec(shape, index_map)


def _linear_kernel(x_ref, w_ref, b_ref, o_ref):
    # (TB, 2048) @ (2048, 128) on the MXU with f32 accumulation, + bias.
    o_ref[...] = (
        jnp.dot(x_ref[...], w_ref[...], preferred_element_type=jnp.float32)
        + b_ref[...]
    ).astype(o_ref.dtype)


def prepare_params(w, b, compute_dtype=jnp.bfloat16):
    """One-time parameter prep (hoisted out of the per-call path).

    w: (10, 2048) PyTorch-layout weight, b: (10,) bias, both f32.
    Returns W^T zero-padded to (2048, 128) in `compute_dtype` and the bias
    zero-padded to (1, 128) in f32 (bias is added after f32 accumulation).
    """
    w_t = jnp.asarray(w, jnp.float32).T                      # (2048, 10)
    w_pad = (jnp.zeros((IN_FEATURES, PADDED_CLASSES), compute_dtype)
             .at[:, :NUM_CLASSES].set(w_t.astype(compute_dtype)))
    b_pad = (jnp.zeros((1, PADDED_CLASSES), jnp.float32)
             .at[:, :NUM_CLASSES].set(
                 jnp.asarray(b, jnp.float32).reshape(1, NUM_CLASSES)))
    return w_pad, b_pad


def _pick_batch_tile(batch, tb, sublane):
    if batch <= sublane:
        return batch               # single full-extent block (always legal)
    tb = min(tb, batch)
    return max(sublane, (tb // sublane) * sublane)


def linear_classifier_forward(x, w_pad, b_pad, *, tb=None):
    """x: (B, 2048), w_pad: (2048, 128) [bf16 or f32], b_pad: (1, 128) f32.

    Returns softmax over the batch axis (dim=0) of x @ W + b, shape (B, 10).
    """
    B, F = x.shape
    assert F == IN_FEATURES
    compute_dtype = w_pad.dtype
    # In a real pipeline x should already be stored in `compute_dtype` (bf16)
    # so this cast at the pallas_call boundary is a no-op.
    x_in = x.astype(compute_dtype)

    # bf16 packs two rows per 32-bit sublane -> batch tile must be a multiple
    # of 16 (8 for f32).  Default sized so x(x2) + W + out(x2) stays well
    # under every generation's default scoped-VMEM budget (incl. v5e 16 MiB).
    sublane = 16 if compute_dtype == jnp.bfloat16 else 8
    if tb is None:
        tb = 1024 if compute_dtype == jnp.bfloat16 else 512
    tb = _pick_batch_tile(B, tb, sublane)

    # No wrapper-side x padding: ragged last tile is handled by Pallas and
    # stores to out-of-bounds output rows are dropped.
    grid = (pl.cdiv(B, tb),)

    logits_pad = pl.pallas_call(
        _linear_kernel,
        out_shape=jax.ShapeDtypeStruct((B, PADDED_CLASSES), jnp.float32),
        grid=grid,
        in_specs=[
            # x: tiled over batch; double-buffered by Pallas for DMA/compute overlap.
            pl.BlockSpec((tb, IN_FEATURES), lambda i: (i, 0)),
            # W and b: constant block index -> fetched once, VMEM-resident,
            # single-buffered.
            _resident_spec((IN_FEATURES, PADDED_CLASSES)),
            _resident_spec((1, PADDED_CLASSES)),
        ],
        out_specs=pl.BlockSpec((tb, PADDED_CLASSES), lambda i: (i, 0)),
        compiler_params=pltpu.CompilerParams(
            # Batch tiles are independent (the softmax lives in the wrapper).
            dimension_semantics=("parallel",),
        ),
    )(x_in, w_pad, b_pad)

    logits = logits_pad[:, :NUM_CLASSES]
    # Faithful reproduction of torch.nn.functional.softmax(x, dim=0):
    # softmax over the BATCH axis, computed on the tiny (B, 10) logits.
    return jax.nn.softmax(logits, axis=0)


def init_raw_params(key):
    """torch.nn.Linear default init: U(-1/sqrt(fan_in), +1/sqrt(fan_in))."""
    kw, kb = jax.random.split(key)
    bound = 1.0 / jnp.sqrt(jnp.float32(IN_FEATURES))
    w = jax.random.uniform(kw, (NUM_CLASSES, IN_FEATURES), jnp.float32,
                           minval=-bound, maxval=bound)   # PyTorch (out, in)
    b = jax.random.uniform(kb, (NUM_CLASSES,), jnp.float32,
                           minval=-bound, maxval=bound)
    return w, b


if __name__ == "__main__":
    key = jax.random.PRNGKey(0)
    k_x, k_p = jax.random.split(key)

    # Small shapes; B=24 exercises the ragged-last-tile bf16 path (tb=16 ->
    # grid of 2, last tile half-full) and the single-block f32 path (tb=24).
    B = 24
    x = jax.random.normal(k_x, (B, IN_FEATURES), jnp.float32)
    w, b = init_raw_params(k_p)

    # --- bf16 compute path (default) ----------------------------------------
    w_bf16, b_pad = prepare_params(w, b, jnp.bfloat16)
    probs_bf16 = jax.block_until_ready(
        linear_classifier_forward(x, w_bf16, b_pad, tb=16))

    x_bf = x.astype(jnp.bfloat16).astype(jnp.float32)
    w_bf = w.T.astype(jnp.bfloat16).astype(jnp.float32)
    ref_bf16 = jax.nn.softmax(x_bf @ w_bf + b.reshape(1, -1), axis=0)
    assert probs_bf16.shape == (B, NUM_CLASSES)
    assert jnp.allclose(probs_bf16, ref_bf16, atol=1e-4, rtol=1e-3)

    # Default-tile bf16 path (tb auto-chosen) must match as well.
    probs_def = jax.block_until_ready(linear_classifier_forward(x, w_bf16, b_pad))
    assert jnp.allclose(probs_def, ref_bf16, atol=1e-4, rtol=1e-3)

    # --- f32 compute path (matches PyTorch f32 numerics) ---------------------
    w_f32, b_pad_f32 = prepare_params(w, b, jnp.float32)
    probs_f32 = jax.block_until_ready(
        linear_classifier_forward(x, w_f32, b_pad_f32))
    ref_f32 = jax.nn.softmax(x @ w.T + b.reshape(1, -1), axis=0)
    assert jnp.allclose(probs_f32, ref_f32, atol=1e-5, rtol=1e-5)

    print("KERNEL_OK")
</pallas_src>

<mosaic_0001>
module attributes {stable_mosaic.version = 11 : i64} {
  func.func @_linear_kernel(%arg0: i32, %arg1: memref<16x2048xbf16, #tpu.memory_space<vmem>>, %arg2: memref<2048x128xbf16, #tpu.memory_space<vmem>>, %arg3: memref<1x128xf32, #tpu.memory_space<vmem>>, %arg4: memref<16x128xf32, #tpu.memory_space<vmem>>) attributes {dimension_semantics = [#tpu.dimension_semantics<parallel>], iteration_bounds = array<i64: 2>, scalar_prefetch = 0 : i64, scratch_operands = 0 : i64, tpu.core_type = #tpu.core_type<tc>, window_params = [{transform_indices = @transform_0, window_bounds = array<i64: 16, 2048>}, {pipeline_mode = #tpu.pipeline_mode<synchronous>, transform_indices = @transform_1, window_bounds = array<i64: 2048, 128>}, {pipeline_mode = #tpu.pipeline_mode<synchronous>, transform_indices = @transform_2, window_bounds = array<i64: 1, 128>}, {transform_indices = @transform_3, window_bounds = array<i64: 16, 128>}]} {
    %c0 = arith.constant 0 : index
    %c0_0 = arith.constant 0 : index
    %0 = vector.load %arg1[%c0, %c0_0] : memref<16x2048xbf16, #tpu.memory_space<vmem>>, vector<16x2048xbf16>
    %c0_1 = arith.constant 0 : index
    %c0_2 = arith.constant 0 : index
    %1 = vector.load %arg2[%c0_1, %c0_2] : memref<2048x128xbf16, #tpu.memory_space<vmem>>, vector<2048x128xbf16>
    %cst = arith.constant dense<0.000000e+00> : vector<16x128xf32>
    %2 = tpu.matmul %0, %1, %cst {dimension_numbers = #tpu.dot_dimension_numbers<[1], [0], [0], [1], [0, 0, 1, 1], [], []>} : vector<16x2048xbf16>, vector<2048x128xbf16>, vector<16x128xf32> -> vector<16x128xf32>
    %c0_3 = arith.constant 0 : index
    %c0_4 = arith.constant 0 : index
    %3 = vector.load %arg3[%c0_3, %c0_4] : memref<1x128xf32, #tpu.memory_space<vmem>>, vector<1x128xf32>
    %4 = vector.broadcast %3 : vector<1x128xf32> to vector<16x128xf32>
    %5 = arith.addf %2, %4 : vector<16x128xf32>
    %c0_5 = arith.constant 0 : index
    %c0_6 = arith.constant 0 : index
    %6 = vector.load %arg4[%c0_5, %c0_6] : memref<16x128xf32, #tpu.memory_space<vmem>>, vector<16x128xf32>
    tpu.vector_store %arg4[%c0_5, %c0_6], %5 {strides = array<i32>} : memref<16x128xf32, #tpu.memory_space<vmem>>, vector<16x128xf32>,
    return
  }
  func.func @transform_0(%arg0: i32) -> (i32, i32) {
    %c0_i32 = arith.constant 0 : i32
    %c0_i32_0 = arith.constant 0 : i32
    return %arg0, %c0_i32 : i32, i32
  }
  func.func @transform_1(%arg0: i32) -> (i32, i32) {
    %c0_i32 = arith.constant 0 : i32
    %c0_i32_0 = arith.constant 0 : i32
    %c0_i32_1 = arith.constant 0 : i32
    return %c0_i32, %c0_i32_0 : i32, i32
  }
  func.func @transform_2(%arg0: i32) -> (i32, i32) {
    %c0_i32 = arith.constant 0 : i32
    %c0_i32_0 = arith.constant 0 : i32
    %c0_i32_1 = arith.constant 0 : i32
    return %c0_i32, %c0_i32_0 : i32, i32
  }
  func.func @transform_3(%arg0: i32) -> (i32, i32) {
    %c0_i32 = arith.constant 0 : i32
    %c0_i32_0 = arith.constant 0 : i32
    return %arg0, %c0_i32 : i32, i32
  }
}

</mosaic_0001>

<llo_original>
// kernel: tpu_custom_call.1
$region0: #{tpu_custom_call.1}
  #allocation0 [shape = 'u32[]', space=smem, size = 0x4, offset = 0x4, fixed_abs, tag = 'smem constant byte address 0x4 - core index']
  #allocation1 [shape = 'u32[144,128]{1,0:T(1,128)}', space=vmem, size = 0x12000, scoped, tag = 'internal scratch']
  %s0 = inlined_call_operand.hbm [shape: bf16[24,2048], index: 0, kind: input, shape index: {}]
  %s1 = inlined_call_operand.hbm [shape: bf16[2048,128], index: 1, kind: input, shape index: {}]
  %s2 = inlined_call_operand.vmem [shape: f32[1,128], index: 2, kind: input, shape index: {}]
  %s3 = inlined_call_operand.hbm [shape: f32[24,128], index: 3, kind: output, shape index: {}]
  %s4 = sld [smem:[#allocation0]]
  $region53: #{tpu_custom_call.1} parent=0
    _
  %s6 = ssub.s32 1, %s4
  %s7 = scalar_select 0, %s6, %s4
  $region1: #{tpu_custom_call.1} parent=0
    #allocation2 [shape = 'u8[131072]{0}', space=vmem, size = 0x20000, scoped, tag = 'input window, operand 0']
    #allocation3 [shape = 's32[2]{0}', space=sflag, size = 0x8, scoped, tag = 'scoped memory for tpu_custom_call.1']
    #allocation4 [shape = 's32[2]{0}', space=sflag, size = 0x8, scoped, tag = 'scoped memory for tpu_custom_call.1']
    #allocation5 [shape = 'u8[524288]{0}', space=vmem, size = 0x80000, scoped, tag = 'input window, operand 1, single buffered']
    #allocation6 [shape = 's32[1]{0}', space=sflag, size = 0x4, scoped, tag = 'scoped memory for tpu_custom_call.1']
    #allocation7 [shape = 'u8[16384]{0}', space=vmem, size = 0x4000, scoped, tag = 'output window, operand 0']
    %8 = vsyncpa [#allocation3], 0
    %s9 = scalar_lea.sflag [#allocation3], 1
    %10 = vsyncpa %s9, 0
    %11 = vsyncpa [#allocation6], 0
    %12 = vsyncpa [#allocation4], 0
    %s13 = scalar_lea.sflag [#allocation4], 1
    %14 = vsyncpa %s13, 0
    loop: start=0, step=1, limit=4
    $region2: #{tpu_custom_call.1} parent=1 // loop_pre_header
      _
    $region3: #{tpu_custom_call.1} parent=1 // loop_header
      %s16 = sphi 0, %s20
      %p17 = scmp.ge.s32.totalorder %s16, 4
      %s26 = sphi 0, %s28
      %s29 = sphi 0, %s26
      %s30 = sphi 0, %s29
      %s46 = sphi 0, %s30
      %s50 = sphi 0, %s50
      %s52 = sphi 0, %s50
      %s53 = sphi 0, %s52
      %s67 = sphi 0, %s53
      %s71 = sphi 0, %s71
      %s73 = sphi 0, %s71
      %s74 = sphi 0, %s73
      %s88 = sphi 0, %s74
      %s94 = sphi 0, %s96
      %s97 = sphi 0, %s94
      %s98 = sphi 0, %s97
      %s114 = sphi 0, %s98
    $region4: #{tpu_custom_call.1} parent=1 // loop_header_branch
      %19 = sbr.rel (%p17) target = $region8
    $region5: #{tpu_custom_call.1} parent=1 // loop_body
      %s21 = ssub.s32 %s16, 1
      %s22 = ssub.s32 %s16, 2
      %s23 = sadd.s32 %s16, 1
      %s24 = ssub.s32 %s16, %s23
      %p25 = scmp.eq.s32.totalorder %s24, 0
      %s27 = sadd.s32 %s26, 1
      %s28 = scalar_select %p25, %s26, %s27
      %p31 = pneg %p25
      %p32 = scmp.eq.s32.totalorder %s16, 1
      %p33 = por %p31, %p32
      %p34 = scmp.ne.s32.totalorder %s26, %s29
      %p35 = scmp.eq.s32.totalorder %s16, 0
      %p36 = por %p34, %p35
      %p37 = scmp.ne.s32.totalorder %s26, %s29
      %p38 = scmp.eq.s32.totalorder %s21, 1
      %p39 = por %p37, %p38
      %p40 = scmp.ne.s32.totalorder %s29, %s30
      %p41 = scmp.eq.s32.totalorder %s21, 0
      %p42 = por %p40, %p41
      %p43 = scmp.ne.s32.totalorder %s29, %s30
      %p44 = scmp.eq.s32.totalorder %s22, 1
      %p45 = por %p43, %p44
      %p47 = scmp.ne.s32.totalorder %s30, %s46
      %p48 = scmp.eq.s32.totalorder %s22, 0
      %p49 = por %p47, %p48
      %s51 = sadd.s32 %s50, 1
      %p54 = scmp.eq.s32.totalorder %s16, 1
      %p55 = scmp.ne.s32.totalorder %s50, %s52
      %p56 = scmp.eq.s32.totalorder %s16, 0
      %p57 = por %p55, %p56
      %p58 = scmp.ne.s32.totalorder %s50, %s52
      %p59 = scmp.eq.s32.totalorder %s21, 1
      %p60 = por %p58, %p59
      %p61 = scmp.ne.s32.totalorder %s52, %s53
      %p62 = scmp.eq.s32.totalorder %s21, 0
      %p63 = por %p61, %p62
      %p64 = scmp.ne.s32.totalorder %s52, %s53
      %p65 = scmp.eq.s32.totalorder %s22, 1
      %p66 = por %p64, %p65
      %p68 = scmp.ne.s32.totalorder %s53, %s67
      %p69 = scmp.eq.s32.totalorder %s22, 0
      %p70 = por %p68, %p69
      %s72 = sadd.s32 %s71, 1
      %p75 = scmp.eq.s32.totalorder %s16, 1
      %p76 = scmp.ne.s32.totalorder %s71, %s73
      %p77 = scmp.eq.s32.totalorder %s16, 0
      %p78 = por %p76, %p77
      %p79 = scmp.ne.s32.totalorder %s71, %s73
      %p80 = scmp.eq.s32.totalorder %s21, 1
      %p81 = por %p79, %p80
      %p82 = scmp.ne.s32.totalorder %s73, %s74
      %p83 = scmp.eq.s32.totalorder %s21, 0
      %p84 = por %p82, %p83
      %p85 = scmp.ne.s32.totalorder %s73, %s74
      %p86 = scmp.eq.s32.totalorder %s22, 1
      %p87 = por %p85, %p86
      %p89 = scmp.ne.s32.totalorder %s74, %s88
      %p90 = scmp.eq.s32.totalorder %s22, 0
      %p91 = por %p89, %p90
      %s92 = ssub.s32 %s16, %s23
      %p93 = scmp.eq.s32.totalorder %s92, 0
      %s95 = sadd.s32 %s94, 1
      %s96 = scalar_select %p93, %s94, %s95
      %p99 = pneg %p93
      %p100 = scmp.eq.s32.totalorder %s16, 1
      %p101 = por %p99, %p100
      %p102 = scmp.ne.s32.totalorder %s94, %s97
      %p103 = scmp.eq.s32.totalorder %s16, 0
      %p104 = por %p102, %p103
      %p105 = scmp.ne.s32.totalorder %s94, %s97
      %p106 = scmp.eq.s32.totalorder %s21, 1
      %p107 = por %p105, %p106
      %p108 = scmp.ne.s32.totalorder %s97, %s98
      %p109 = scmp.eq.s32.totalorder %s21, 0
      %p110 = por %p108, %p109
      %p111 = scmp.ne.s32.totalorder %s97, %s98
      %p112 = scmp.eq.s32.totalorder %s22, 1
      %p113 = por %p111, %p112
      %p115 = scmp.ne.s32.totalorder %s98, %s114
      %p116 = scmp.eq.s32.totalorder %s22, 0
      %p117 = por %p115, %p116
      %p118 = scmp.le.s32.totalorder 1, %s16
      %p119 = scmp.lt.s32.totalorder %s16, 3
      %p120 = pnand %p118, %p119
      %p121 = pneg %p120
      // Predicated region
      $region9: #{tpu_custom_call.1} parent=5 // pred_check
        _
      $region10: #{tpu_custom_call.1} parent=5 // pred_check_branch
        %123 = sbr.rel (%p120) target = $region12
      $region11: #{tpu_custom_call.1} parent=5 // pred_region
        %s124 = ssub.s32 %s16, 1
        // Predicated region
        $region13: #{tpu_custom_call.1} parent=11 // pred_check
          %p125 = pneg %p63
        $region14: #{tpu_custom_call.1} parent=11 // pred_check_branch
          %127 = sbr.rel (%p125) target = $region16
        $region15: #{tpu_custom_call.1} parent=11 // pred_region
          %s129 = ssub.s32 16384, 16384
          %130 = vsyncadd [#allocation6], %s129
          %s131 = sshll.u32 [#allocation5], 4
          %s132 = int_to_ptr.vmem [resolvable:$true] %s131
          %137 = dma.hbm_to_vmem [thread:$0]  %s1, 16384, %s132, [#allocation6], 64, 64, 4
        $region16: #{tpu_custom_call.1} parent=11 // pred_fallthru
          _
        // Predicated region
        $region17: #{tpu_custom_call.1} parent=11 // pred_check
          %p138 = pneg %p84
        $region18: #{tpu_custom_call.1} parent=11 // pred_check_branch
          %140 = sbr.rel (%p138) target = $region20
        $region19: #{tpu_custom_call.1} parent=11 // pred_region
          _
        $region20: #{tpu_custom_call.1} parent=11 // pred_fallthru
          _
      $region12: #{tpu_custom_call.1} parent=5 // pred_fallthru
        _
      %p141 = scmp.lt.s32.totalorder %s16, 2
      // Predicated region
      $region21: #{tpu_custom_call.1} parent=5 // pred_check
        %p142 = pneg %p141
      $region22: #{tpu_custom_call.1} parent=5 // pred_check_branch
        %144 = sbr.rel (%p142) target = $region24
      $region23: #{tpu_custom_call.1} parent=5 // pred_region
        // Predicated region
        $region25: #{tpu_custom_call.1} parent=23 // pred_check
          %p145 = pneg %p36
        $region26: #{tpu_custom_call.1} parent=23 // pred_check_branch
          %147 = sbr.rel (%p145) target = $region28
        $region27: #{tpu_custom_call.1} parent=23 // pred_region
          %s148 = sand.u32 %s26, 1
          %s149 = scalar_lea.sflag [#allocation3], %s148
          %s150 = sand.u32 %s26, 1
          %s151 = smul.addr %s150, 128
          %s152 = scalar_lea.vmem [#allocation2], %s151
          %s153 = smul.u32 2, %s16
          %s154 = ssub.s32 3, %s153
          %p155 = scmp.lt.s32.totalorder %s154, 2
          %s156 = scalar_select %p155, %s154, 2
          %s157 = smul.u32 64, %s156
          %s158 = smul.u32 %s157, 16
          %s160 = ssub.s32 2048, %s158
          %161 = vsyncadd %s149, %s160
          %p162 = scmp.ne.s32.totalorder 0, %s158
          %s163 = smul.addr %s153, 16
          %s164 = smul.addr %s163, 64
          %s165 = scalar_lea.hbm %s0, %s164
          %s166 = smul.u32 64, %s156
          %s167 = sshll.u32 %s152, 4
          %s168 = int_to_ptr.vmem [resolvable:$true] %s167
          %s169 = sshll.u32 %s166, 4
          %173 = dma.hbm_to_vmem [thread:$0]  (%p162), %s165, %s169, %s168, %s149, 1024, 1024, 64
        $region28: #{tpu_custom_call.1} parent=23 // pred_fallthru
          _
      $region24: #{tpu_custom_call.1} parent=5 // pred_fallthru
        _
      %p174 = scmp.le.s32.totalorder 1, %s16
      %p175 = scmp.lt.s32.totalorder %s16, 3
      %p176 = pnand %p174, %p175
      %p177 = pneg %p176
      // Predicated region
      $region29: #{tpu_custom_call.1} parent=5 // pred_check
        _
      $region30: #{tpu_custom_call.1} parent=5 // pred_check_branch
        %179 = sbr.rel (%p176) target = $region32
      $region31: #{tpu_custom_call.1} parent=5 // pred_region
        %s180 = ssub.s32 %s16, 1
        %s181 = sand.u32 %s29, 1
        %s182 = scalar_lea.sflag [#allocation3], %s181
        %s183 = sand.u32 %s29, 1
        %s184 = smul.addr %s183, 128
        %s185 = scalar_lea.vmem [#allocation2], %s184
        // Predicated region
        $region33: #{tpu_custom_call.1} parent=31 // pred_check
          %p186 = pneg %p42
        $region34: #{tpu_custom_call.1} parent=31 // pred_check_branch
          %188 = sbr.rel (%p186) target = $region36
        $region35: #{tpu_custom_call.1} parent=31 // pred_region
          %189 = dma.done %s182, 2048
        $region36: #{tpu_custom_call.1} parent=31 // pred_fallthru
          _
        // Predicated region
        $region37: #{tpu_custom_call.1} parent=31 // pred_check
          %p190 = pneg %p63
        $region38: #{tpu_custom_call.1} parent=31 // pred_check_branch
          %192 = sbr.rel (%p190) target = $region40
        $region39: #{tpu_custom_call.1} parent=31 // pred_region
          %193 = dma.done [#allocation6], 16384
        $region40: #{tpu_custom_call.1} parent=31 // pred_fallthru
          _
        %s194 = sand.u32 %s29, 1
        %s195 = scalar_lea.sflag [#allocation3], %s194
        %s196 = sand.u32 %s29, 1
        %s197 = smul.addr %s196, 128
        %s198 = scalar_lea.vmem [#allocation2], %s197
        %p199 = pneg %p42
        %p200 = pneg %p39
        %p201 = pneg %p63
        %p202 = pneg %p60
        %p203 = pneg %p84
        %p204 = pneg %p81
        %p205 = pneg %p110
        %p206 = pneg %p107
        %s207 = sand.u32 %s97, 1
        %s208 = scalar_lea.sflag [#allocation4], %s207
        %s209 = sand.u32 %s97, 1
        %s210 = smul.addr %s209, 16
        %s211 = scalar_lea.vmem [#allocation7], %s210
        %s212 = smul.u32 2, %s21
        %s213 = ssub.s32 3, %s212
        %p214 = scmp.lt.s32.totalorder %s213, 2
        %s215 = scalar_select %p214, %s213, 2
        %s216 = smul.u32 64, %s215
        %s217 = smul.u32 %s216, 16
        %s218 = smul.u32 2, %s21
        %s219 = ssub.s32 3, %s218
        %p220 = scmp.lt.s32.totalorder %s219, 2
        %s221 = scalar_select %p220, %s219, 2
        %s222 = smul.u32 128, %s221
        %v224 = vld [vmem:[%s185] sm:$0xff]
        %v225 = vld [vmem:[%s185 + $0x8] sm:$0xff]
        %v226 = vld [vmem:[%s185 + $0x10] sm:$0xff]
        %v227 = vld [vmem:[%s185 + $0x18] sm:$0xff]
        %v228 = vld [vmem:[%s185 + $0x20] sm:$0xff]
        %v229 = vld [vmem:[%s185 + $0x28] sm:$0xff]
        %v230 = vld [vmem:[%s185 + $0x30] sm:$0xff]
        %v231 = vld [vmem:[%s185 + $0x38] sm:$0xff]
        %v232 = vld [vmem:[%s185 + $0x40] sm:$0xff]
        %v233 = vld [vmem:[%s185 + $0x48] sm:$0xff]
        %v234 = vld [vmem:[%s185 + $0x50] sm:$0xff]
        %v235 = vld [vmem:[%s185 + $0x58] sm:$0xff]
        %v236 = vld [vmem:[%s185 + $0x60] sm:$0xff]
        %v237 = vld [vmem:[%s185 + $0x68] sm:$0xff]
        %v238 = vld [vmem:[%s185 + $0x70] sm:$0xff]
        %v239 = vld [vmem:[%s185 + $0x78] sm:$0xff]
        %v240 = vld [vmem:[#allocation5] sm:$0xf]
        %v241 = vld [vmem:[#allocation5 + $0x4] sm:$0xf]
        %v242 = vld [vmem:[#allocation5 + $0x8] sm:$0xf]
        %v243 = vld [vmem:[#allocation5 + $0xc] sm:$0xf]
        %v244 = vld [vmem:[#allocation5 + $0x10] sm:$0xf]
        %v245 = vld [vmem:[#allocation5 + $0x14] sm:$0xf]
        %v246 = vld [vmem:[#allocation5 + $0x18] sm:$0xf]
        %v247 = vld [vmem:[#allocation5 + $0x1c] sm:$0xf]
        %v248 = vld [vmem:[#allocation5 + $0x20] sm:$0xf]
        %v249 = vld [vmem:[#allocation5 + $0x24] sm:$0xf]
        %v250 = vld [vmem:[#allocation5 + $0x28] sm:$0xf]
        %v251 = vld [vmem:[#allocation5 + $0x2c] sm:$0xf]
        %v252 = vld [vmem:[#allocation5 + $0x30] sm:$0xf]
        %v253 = vld [vmem:[#allocation5 + $0x34] sm:$0xf]
        %v254 = vld [vmem:[#allocation5 + $0x38] sm:$0xf]
        %v255 = vld [vmem:[#allocation5 + $0x3c] sm:$0xf]
        %v256 = vld [vmem:[#allocation5 + $0x40] sm:$0xf]
        %v257 = vld [vmem:[#allocation5 + $0x44] sm:$0xf]
        %v258 = vld [vmem:[#allocation5 + $0x48] sm:$0xf]
        %v259 = vld [vmem:[#allocation5 + $0x4c] sm:$0xf]
        %v260 = vld [vmem:[#allocation5 + $0x50] sm:$0xf]
        %v261 = vld [vmem:[#allocation5 + $0x54] sm:$0xf]
        %v262 = vld [vmem:[#allocation5 + $0x58] sm:$0xf]
        %v263 = vld [vmem:[#allocation5 + $0x5c] sm:$0xf]
        %v264 = vld [vmem:[#allocation5 + $0x60] sm:$0xf]
        %v265 = vld [vmem:[#allocation5 + $0x64] sm:$0xf]
        %v266 = vld [vmem:[#allocation5 + $0x68] sm:$0xf]
        %v267 = vld [vmem:[#allocation5 + $0x6c] sm:$0xf]
        %v268 = vld [vmem:[#allocation5 + $0x70] sm:$0xf]
        %v269 = vld [vmem:[#allocation5 + $0x74] sm:$0xf]
        %v270 = vld [vmem:[#allocation5 + $0x78] sm:$0xf]
        %v271 = vld [vmem:[#allocation5 + $0x7c] sm:$0xf]
        %v272 = vld [vmem:[#allocation5 + $0x80] sm:$0xf]
        %v273 = vld [vmem:[#allocation5 + $0x84] sm:$0xf]
        %v274 = vld [vmem:[#allocation5 + $0x88] sm:$0xf]
        %v275 = vld [vmem:[#allocation5 + $0x8c] sm:$0xf]
        %v276 = vld [vmem:[#allocation5 + $0x90] sm:$0xf]
        %v277 = vld [vmem:[#allocation5 + $0x94] sm:$0xf]
        %v278 = vld [vmem:[#allocation5 + $0x98] sm:$0xf]
        %v279 = vld [vmem:[#allocation5 + $0x9c] sm:$0xf]
        %v280 = vld [vmem:[#allocation5 + $0xa0] sm:$0xf]
        %v281 = vld [vmem:[#allocation5 + $0xa4] sm:$0xf]
        %v282 = vld [vmem:[#allocation5 + $0xa8] sm:$0xf]
        %v283 = vld [vmem:[#allocation5 + $0xac] sm:$0xf]
        %v284 = vld [vmem:[#allocation5 + $0xb0] sm:$0xf]
        %v285 = vld [vmem:[#allocation5 + $0xb4] sm:$0xf]
        %v286 = vld [vmem:[#allocation5 + $0xb8] sm:$0xf]
        %v287 = vld [vmem:[#allocation5 + $0xbc] sm:$0xf]
        %v288 = vld [vmem:[#allocation5 + $0xc0] sm:$0xf]
        %v289 = vld [vmem:[#allocation5 + $0xc4] sm:$0xf]
        %v290 = vld [vmem:[#allocation5 + $0xc8] sm:$0xf]
        %v291 = vld [vmem:[#allocation5 + $0xcc] sm:$0xf]
        %v292 = vld [vmem:[#allocation5 + $0xd0] sm:$0xf]
        %v293 = vld [vmem:[#allocation5 + $0xd4] sm:$0xf]
        %v294 = vld [vmem:[#allocation5 + $0xd8] sm:$0xf]
        %v295 = vld [vmem:[#allocation5 + $0xdc] sm:$0xf]
        %v296 = vld [vmem:[#allocation5 + $0xe0] sm:$0xf]
        %v297 = vld [vmem:[#allocation5 + $0xe4] sm:$0xf]
        %v298 = vld [vmem:[#allocation5 + $0xe8] sm:$0xf]
        %v299 = vld [vmem:[#allocation5 + $0xec] sm:$0xf]
        %v300 = vld [vmem:[#allocation5 + $0xf0] sm:$0xf]
        %v301 = vld [vmem:[#allocation5 + $0xf4] sm:$0xf]
        %v302 = vld [vmem:[#allocation5 + $0xf8] sm:$0xf]
        %v303 = vld [vmem:[#allocation5 + $0xfc] sm:$0xf]
        %v304 = vld [vmem:[#allocation5 + $0x100] sm:$0xf]
        %v305 = vld [vmem:[#allocation5 + $0x104] sm:$0xf]
        %v306 = vld [vmem:[#allocation5 + $0x108] sm:$0xf]
        %v307 = vld [vmem:[#allocation5 + $0x10c] sm:$0xf]
        %v308 = vld [vmem:[#allocation5 + $0x110] sm:$0xf]
        %v309 = vld [vmem:[#allocation5 + $0x114] sm:$0xf]
        %v310 = vld [vmem:[#allocation5 + $0x118] sm:$0xf]
        %v311 = vld [vmem:[#allocation5 + $0x11c] sm:$0xf]
        %v312 = vld [vmem:[#allocation5 + $0x120] sm:$0xf]
        %v313 = vld [vmem:[#allocation5 + $0x124] sm:$0xf]
        %v314 = vld [vmem:[#allocation5 + $0x128] sm:$0xf]
        %v315 = vld [vmem:[#allocation5 + $0x12c] sm:$0xf]
        %v316 = vld [vmem:[#allocation5 + $0x130] sm:$0xf]
        %v317 = vld [vmem:[#allocation5 + $0x134] sm:$0xf]
        %v318 = vld [vmem:[#allocation5 + $0x138] sm:$0xf]
        %v319 = vld [vmem:[#allocation5 + $0x13c] sm:$0xf]
        %v320 = vld [vmem:[#allocation5 + $0x140] sm:$0xf]
        %v321 = vld [vmem:[#allocation5 + $0x144] sm:$0xf]
        %v322 = vld [vmem:[#allocation5 + $0x148] sm:$0xf]
        %v323 = vld [vmem:[#allocation5 + $0x14c] sm:$0xf]
        %v324 = vld [vmem:[#allocation5 + $0x150] sm:$0xf]
        %v325 = vld [vmem:[#allocation5 + $0x154] sm:$0xf]
        %v326 = vld [vmem:[#allocation5 + $0x158] sm:$0xf]
        %v327 = vld [vmem:[#allocation5 + $0x15c] sm:$0xf]
        %v328 = vld [vmem:[#allocation5 + $0x160] sm:$0xf]
        %v329 = vld [vmem:[#allocation5 + $0x164] sm:$0xf]
        %v330 = vld [vmem:[#allocation5 + $0x168] sm:$0xf]
        %v331 = vld [vmem:[#allocation5 + $0x16c] sm:$0xf]
        %v332 = vld [vmem:[#allocation5 + $0x170] sm:$0xf]
        %v333 = vld [vmem:[#allocation5 + $0x174] sm:$0xf]
        %v334 = vld [vmem:[#allocation5 + $0x178] sm:$0xf]
        %v335 = vld [vmem:[#allocation5 + $0x17c] sm:$0xf]
        %v336 = vld [vmem:[#allocation5 + $0x180] sm:$0xf]
        %v337 = vld [vmem:[#allocation5 + $0x184] sm:$0xf]
        %v338 = vld [vmem:[#allocation5 + $0x188] sm:$0xf]
        %v339 = vld [vmem:[#allocation5 + $0x18c] sm:$0xf]
        %v340 = vld [vmem:[#allocation5 + $0x190] sm:$0xf]
        %v341 = vld [vmem:[#allocation5 + $0x194] sm:$0xf]
        %v342 = vld [vmem:[#allocation5 + $0x198] sm:$0xf]
        %v343 = vld [vmem:[#allocation5 + $0x19c] sm:$0xf]
        %v344 = vld [vmem:[#allocation5 + $0x1a0] sm:$0xf]
        %v345 = vld [vmem:[#allocation5 + $0x1a4] sm:$0xf]
        %v346 = vld [vmem:[#allocation5 + $0x1a8] sm:$0xf]
        %v347 = vld [vmem:[#allocation5 + $0x1ac] sm:$0xf]
        %v348 = vld [vmem:[#allocation5 + $0x1b0] sm:$0xf]
        %v349 = vld [vmem:[#allocation5 + $0x1b4] sm:$0xf]
        %v350 = vld [vmem:[#allocation5 + $0x1b8] sm:$0xf]
        %v351 = vld [vmem:[#allocation5 + $0x1bc] sm:$0xf]
        %v352 = vld [vmem:[#allocation5 + $0x1c0] sm:$0xf]
        %v353 = vld [vmem:[#allocation5 + $0x1c4] sm:$0xf]
        %v354 = vld [vmem:[#allocation5 + $0x1c8] sm:$0xf]
        %v355 = vld [vmem:[#allocation5 + $0x1cc] sm:$0xf]
        %v356 = vld [vmem:[#allocation5 + $0x1d0] sm:$0xf]
        %v357 = vld [vmem:[#allocation5 + $0x1d4] sm:$0xf]
        %v358 = vld [vmem:[#allocation5 + $0x1d8] sm:$0xf]
        %v359 = vld [vmem:[#allocation5 + $0x1dc] sm:$0xf]
        %v360 = vld [vmem:[#allocation5 + $0x1e0] sm:$0xf]
        %v361 = vld [vmem:[#allocation5 + $0x1e4] sm:$0xf]
        %v362 = vld [vmem:[#allocation5 + $0x1e8] sm:$0xf]
        %v363 = vld [vmem:[#allocation5 + $0x1ec] sm:$0xf]
        %v364 = vld [vmem:[#allocation5 + $0x1f0] sm:$0xf]
        %v365 = vld [vmem:[#allocation5 + $0x1f4] sm:$0xf]
        %v366 = vld [vmem:[#allocation5 + $0x1f8] sm:$0xf]
        %v367 = vld [vmem:[#allocation5 + $0x1fc] sm:$0xf]
        %v368 = vld [vmem:[#allocation5 + $0x200] sm:$0xf]
        %v369 = vld [vmem:[#allocation5 + $0x204] sm:$0xf]
        %v370 = vld [vmem:[#allocation5 + $0x208] sm:$0xf]
        %v371 = vld [vmem:[#allocation5 + $0x20c] sm:$0xf]
        %v372 = vld [vmem:[#allocation5 + $0x210] sm:$0xf]
        %v373 = vld [vmem:[#allocation5 + $0x214] sm:$0xf]
        %v374 = vld [vmem:[#allocation5 + $0x218] sm:$0xf]
        %v375 = vld [vmem:[#allocation5 + $0x21c] sm:$0xf]
        %v376 = vld [vmem:[#allocation5 + $0x220] sm:$0xf]
        %v377 = vld [vmem:[#allocation5 + $0x224] sm:$0xf]
        %v378 = vld [vmem:[#allocation5 + $0x228] sm:$0xf]
        %v379 = vld [vmem:[#allocation5 + $0x22c] sm:$0xf]
        %v380 = vld [vmem:[#allocation5 + $0x230] sm:$0xf]
        %v381 = vld [vmem:[#allocation5 + $0x234] sm:$0xf]
        %v382 = vld [vmem:[#allocation5 + $0x238] sm:$0xf]
        %v383 = vld [vmem:[#allocation5 + $0x23c] sm:$0xf]
        %v384 = vld [vmem:[#allocation5 + $0x240] sm:$0xf]
        %v385 = vld [vmem:[#allocation5 + $0x244] sm:$0xf]
        %v386 = vld [vmem:[#allocation5 + $0x248] sm:$0xf]
        %v387 = vld [vmem:[#allocation5 + $0x24c] sm:$0xf]
        %v388 = vld [vmem:[#allocation5 + $0x250] sm:$0xf]
        %v389 = vld [vmem:[#allocation5 + $0x254] sm:$0xf]
        %v390 = vld [vmem:[#allocation5 + $0x258] sm:$0xf]
        %v391 = vld [vmem:[#allocation5 + $0x25c] sm:$0xf]
        %v392 = vld [vmem:[#allocation5 + $0x260] sm:$0xf]
        %v393 = vld [vmem:[#allocation5 + $0x264] sm:$0xf]
        %v394 = vld [vmem:[#allocation5 + $0x268] sm:$0xf]
        %v395 = vld [vmem:[#allocation5 + $0x26c] sm:$0xf]
        %v396 = vld [vmem:[#allocation5 + $0x270] sm:$0xf]
        %v397 = vld [vmem:[#allocation5 + $0x274] sm:$0xf]
        %v398 = vld [vmem:[#allocation5 + $0x278] sm:$0xf]
        %v399 = vld [vmem:[#allocation5 + $0x27c] sm:$0xf]
        %v400 = vld [vmem:[#allocation5 + $0x280] sm:$0xf]
        %v401 = vld [vmem:[#allocation5 + $0x284] sm:$0xf]
        %v402 = vld [vmem:[#allocation5 + $0x288] sm:$0xf]
        %v403 = vld [vmem:[#allocation5 + $0x28c] sm:$0xf]
        %v404 = vld [vmem:[#allocation5 + $0x290] sm:$0xf]
        %v405 = vld [vmem:[#allocation5 + $0x294] sm:$0xf]
        %v406 = vld [vmem:[#allocation5 + $0x298] sm:$0xf]
        %v407 = vld [vmem:[#allocation5 + $0x29c] sm:$0xf]
        %v408 = vld [vmem:[#allocation5 + $0x2a0] sm:$0xf]
        %v409 = vld [vmem:[#allocation5 + $0x2a4] sm:$0xf]
        %v410 = vld [vmem:[#allocation5 + $0x2a8] sm:$0xf]
        %v411 = vld [vmem:[#allocation5 + $0x2ac] sm:$0xf]
        %v412 = vld [vmem:[#allocation5 + $0x2b0] sm:$0xf]
        %v413 = vld [vmem:[#allocation5 + $0x2b4] sm:$0xf]
        %v414 = vld [vmem:[#allocation5 + $0x2b8] sm:$0xf]
        %v415 = vld [vmem:[#allocation5 + $0x2bc] sm:$0xf]
        %v416 = vld [vmem:[#allocation5 + $0x2c0] sm:$0xf]
        %v417 = vld [vmem:[#allocation5 + $0x2c4] sm:$0xf]
        %v418 = vld [vmem:[#allocation5 + $0x2c8] sm:$0xf]
        %v419 = vld [vmem:[#allocation5 + $0x2cc] sm:$0xf]
        %v420 = vld [vmem:[#allocation5 + $0x2d0] sm:$0xf]
        %v421 = vld [vmem:[#allocation5 + $0x2d4] sm:$0xf]
        %v422 = vld [vmem:[#allocation5 + $0x2d8] sm:$0xf]
        %v423 = vld [vmem:[#allocation5 + $0x2dc] sm:$0xf]
        %v424 = vld [vmem:[#allocation5 + $0x2e0] sm:$0xf]
        %v425 = vld [vmem:[#allocation5 + $0x2e4] sm:$0xf]
        %v426 = vld [vmem:[#allocation5 + $0x2e8] sm:$0xf]
        %v427 = vld [vmem:[#allocation5 + $0x2ec] sm:$0xf]
        %v428 = vld [vmem:[#allocation5 + $0x2f0] sm:$0xf]
        %v429 = vld [vmem:[#allocation5 + $0x2f4] sm:$0xf]
        %v430 = vld [vmem:[#allocation5 + $0x2f8] sm:$0xf]
        %v431 = vld [vmem:[#allocation5 + $0x2fc] sm:$0xf]
        %v432 = vld [vmem:[#allocation5 + $0x300] sm:$0xf]
        %v433 = vld [vmem:[#allocation5 + $0x304] sm:$0xf]
        %v434 = vld [vmem:[#allocation5 + $0x308] sm:$0xf]
        %v435 = vld [vmem:[#allocation5 + $0x30c] sm:$0xf]
        %v436 = vld [vmem:[#allocation5 + $0x310] sm:$0xf]
        %v437 = vld [vmem:[#allocation5 + $0x314] sm:$0xf]
        %v438 = vld [vmem:[#allocation5 + $0x318] sm:$0xf]
        %v439 = vld [vmem:[#allocation5 + $0x31c] sm:$0xf]
        %v440 = vld [vmem:[#allocation5 + $0x320] sm:$0xf]
        %v441 = vld [vmem:[#allocation5 + $0x324] sm:$0xf]
        %v442 = vld [vmem:[#allocation5 + $0x328] sm:$0xf]
        %v443 = vld [vmem:[#allocation5 + $0x32c] sm:$0xf]
        %v444 = vld [vmem:[#allocation5 + $0x330] sm:$0xf]
        %v445 = vld [vmem:[#allocation5 + $0x334] sm:$0xf]
        %v446 = vld [vmem:[#allocation5 + $0x338] sm:$0xf]
        %v447 = vld [vmem:[#allocation5 + $0x33c] sm:$0xf]
        %v448 = vld [vmem:[#allocation5 + $0x340] sm:$0xf]
        %v449 = vld [vmem:[#allocation5 + $0x344] sm:$0xf]
        %v450 = vld [vmem:[#allocation5 + $0x348] sm:$0xf]
        %v451 = vld [vmem:[#allocation5 + $0x34c] sm:$0xf]
        %v452 = vld [vmem:[#allocation5 + $0x350] sm:$0xf]
        %v453 = vld [vmem:[#allocation5 + $0x354] sm:$0xf]
        %v454 = vld [vmem:[#allocation5 + $0x358] sm:$0xf]
        %v455 = vld [vmem:[#allocation5 + $0x35c] sm:$0xf]
        %v456 = vld [vmem:[#allocation5 + $0x360] sm:$0xf]
        %v457 = vld [vmem:[#allocation5 + $0x364] sm:$0xf]
        %v458 = vld [vmem:[#allocation5 + $0x368] sm:$0xf]
        %v459 = vld [vmem:[#allocation5 + $0x36c] sm:$0xf]
        %v460 = vld [vmem:[#allocation5 + $0x370] sm:$0xf]
        %v461 = vld [vmem:[#allocation5 + $0x374] sm:$0xf]
        %v462 = vld [vmem:[#allocation5 + $0x378] sm:$0xf]
        %v463 = vld [vmem:[#allocation5 + $0x37c] sm:$0xf]
        %v464 = vld [vmem:[#allocation5 + $0x380] sm:$0xf]
        %v465 = vld [vmem:[#allocation5 + $0x384] sm:$0xf]
        %v466 = vld [vmem:[#allocation5 + $0x388] sm:$0xf]
        %v467 = vld [vmem:[#allocation5 + $0x38c] sm:$0xf]
        %v468 = vld [vmem:[#allocation5 + $0x390] sm:$0xf]
        %v469 = vld [vmem:[#allocation5 + $0x394] sm:$0xf]
        %v470 = vld [vmem:[#allocation5 + $0x398] sm:$0xf]
        %v471 = vld [vmem:[#allocation5 + $0x39c] sm:$0xf]
        %v472 = vld [vmem:[#allocation5 + $0x3a0] sm:$0xf]
        %v473 = vld [vmem:[#allocation5 + $0x3a4] sm:$0xf]
        %v474 = vld [vmem:[#allocation5 + $0x3a8] sm:$0xf]
        %v475 = vld [vmem:[#allocation5 + $0x3ac] sm:$0xf]
        %v476 = vld [vmem:[#allocation5 + $0x3b0] sm:$0xf]
        %v477 = vld [vmem:[#allocation5 + $0x3b4] sm:$0xf]
        %v478 = vld [vmem:[#allocation5 + $0x3b8] sm:$0xf]
        %v479 = vld [vmem:[#allocation5 + $0x3bc] sm:$0xf]
        %v480 = vld [vmem:[#allocation5 + $0x3c0] sm:$0xf]
        %v481 = vld [vmem:[#allocation5 + $0x3c4] sm:$0xf]
        %v482 = vld [vmem:[#allocation5 + $0x3c8] sm:$0xf]
        %v483 = vld [vmem:[#allocation5 + $0x3cc] sm:$0xf]
        %v484 = vld [vmem:[#allocation5 + $0x3d0] sm:$0xf]
        %v485 = vld [vmem:[#allocation5 + $0x3d4] sm:$0xf]
        %v486 = vld [vmem:[#allocation5 + $0x3d8] sm:$0xf]
        %v487 = vld [vmem:[#allocation5 + $0x3dc] sm:$0xf]
        %v488 = vld [vmem:[#allocation5 + $0x3e0] sm:$0xf]
        %v489 = vld [vmem:[#allocation5 + $0x3e4] sm:$0xf]
        %v490 = vld [vmem:[#allocation5 + $0x3e8] sm:$0xf]
        %v491 = vld [vmem:[#allocation5 + $0x3ec] sm:$0xf]
        %v492 = vld [vmem:[#allocation5 + $0x3f0] sm:$0xf]
        %v493 = vld [vmem:[#allocation5 + $0x3f4] sm:$0xf]
        %v494 = vld [vmem:[#allocation5 + $0x3f8] sm:$0xf]
        %v495 = vld [vmem:[#allocation5 + $0x3fc] sm:$0xf]
        %v496 = vld [vmem:[%s2] sm:$0x1]
        %v498 = vlaneseq
        %v499 = vshrl.u32 %v498, 7
        %v500 = vsub.s32 0, %v499
        %v501 = vrot.slane %v496, %v500
        %v519 = vunpack.c.l.b16 %v224
        %v520 = vunpack.c.h.b16 %v224
        %v521 = vunpack.c.l.b16 %v225
        %v522 = vunpack.c.h.b16 %v225
        %v523 = vunpack.c.l.b16 %v226
        %v524 = vunpack.c.h.b16 %v226
        %v525 = vunpack.c.l.b16 %v227
        %v526 = vunpack.c.h.b16 %v227
        %v527 = vunpack.c.l.b16 %v228
        %v528 = vunpack.c.h.b16 %v228
        %v529 = vunpack.c.l.b16 %v229
        %v530 = vunpack.c.h.b16 %v229
        %v531 = vunpack.c.l.b16 %v230
        %v532 = vunpack.c.h.b16 %v230
        %v533 = vunpack.c.l.b16 %v231
        %v534 = vunpack.c.h.b16 %v231
        %v535 = vunpack.c.l.b16 %v232
        %v536 = vunpack.c.h.b16 %v232
        %v537 = vunpack.c.l.b16 %v233
        %v538 = vunpack.c.h.b16 %v233
        %v539 = vunpack.c.l.b16 %v234
        %v540 = vunpack.c.h.b16 %v234
        %v541 = vunpack.c.l.b16 %v235
        %v542 = vunpack.c.h.b16 %v235
        %v543 = vunpack.c.l.b16 %v236
        %v544 = vunpack.c.h.b16 %v236
        %v545 = vunpack.c.l.b16 %v237
        %v546 = vunpack.c.h.b16 %v237
        %v547 = vunpack.c.l.b16 %v238
        %v548 = vunpack.c.h.b16 %v238
        %v549 = vunpack.c.l.b16 %v239
        %v550 = vunpack.c.h.b16 %v239
        %v551 = vpack.c.b16 %v535, %v519
        %v552 = vpack.c.b16 %v536, %v520
        %v553 = vpack.c.b16 %v537, %v521
        %v554 = vpack.c.b16 %v538, %v522
        %v555 = vpack.c.b16 %v539, %v523
        %v556 = vpack.c.b16 %v540, %v524
        %v557 = vpack.c.b16 %v541, %v525
        %v558 = vpack.c.b16 %v542, %v526
        %v559 = vpack.c.b16 %v543, %v527
        %v560 = vpack.c.b16 %v544, %v528
        %v561 = vpack.c.b16 %v545, %v529
        %v562 = vpack.c.b16 %v546, %v530
        %v563 = vpack.c.b16 %v547, %v531
        %v564 = vpack.c.b16 %v548, %v532
        %v565 = vpack.c.b16 %v549, %v533
        %v566 = vpack.c.b16 %v550, %v534
        %v839 = vunpack.c.l.b16 %v240
        %v840 = vunpack.c.l.b16 %v241
        %v841 = vunpack.c.l.b16 %v242
        %v842 = vunpack.c.l.b16 %v243
        %v843 = vunpack.c.l.b16 %v244
        %v844 = vunpack.c.l.b16 %v245
        %v845 = vunpack.c.l.b16 %v246
        %v846 = vunpack.c.l.b16 %v247
        %v847 = vunpack.c.l.b16 %v248
        %v848 = vunpack.c.l.b16 %v249
        %v849 = vunpack.c.l.b16 %v250
        %v850 = vunpack.c.l.b16 %v251
        %v851 = vunpack.c.l.b16 %v252
        %v852 = vunpack.c.l.b16 %v253
        %v853 = vunpack.c.l.b16 %v254
        %v854 = vunpack.c.l.b16 %v255
        %v855 = vunpack.c.l.b16 %v256
        %v856 = vunpack.c.l.b16 %v257
        %v857 = vunpack.c.l.b16 %v258
        %v858 = vunpack.c.l.b16 %v259
        %v859 = vunpack.c.l.b16 %v260
        %v860 = vunpack.c.l.b16 %v261
        %v861 = vunpack.c.l.b16 %v262
        %v862 = vunpack.c.l.b16 %v263
        %v863 = vunpack.c.l.b16 %v264
        %v864 = vunpack.c.l.b16 %v265
        %v865 = vunpack.c.l.b16 %v266
        %v866 = vunpack.c.l.b16 %v267
        %v867 = vunpack.c.l.b16 %v268
        %v868 = vunpack.c.l.b16 %v269
        %v869 = vunpack.c.l.b16 %v270
        %v870 = vunpack.c.l.b16 %v271
        %v871 = vunpack.c.l.b16 %v272
        %v872 = vunpack.c.l.b16 %v273
        %v873 = vunpack.c.l.b16 %v274
        %v874 = vunpack.c.l.b16 %v275
        %v875 = vunpack.c.l.b16 %v276
        %v876 = vunpack.c.l.b16 %v277
        %v877 = vunpack.c.l.b16 %v278
        %v878 = vunpack.c.l.b16 %v279
        %v879 = vunpack.c.l.b16 %v280
        %v880 = vunpack.c.l.b16 %v281
        %v881 = vunpack.c.l.b16 %v282
        %v882 = vunpack.c.l.b16 %v283
        %v883 = vunpack.c.l.b16 %v284
        %v884 = vunpack.c.l.b16 %v285
        %v885 = vunpack.c.l.b16 %v286
        %v886 = vunpack.c.l.b16 %v287
        %v887 = vunpack.c.l.b16 %v288
        %v888 = vunpack.c.l.b16 %v289
        %v889 = vunpack.c.l.b16 %v290
        %v890 = vunpack.c.l.b16 %v291
        %v891 = vunpack.c.l.b16 %v292
        %v892 = vunpack.c.l.b16 %v293
        %v893 = vunpack.c.l.b16 %v294
        %v894 = vunpack.c.l.b16 %v295
        %v895 = vunpack.c.l.b16 %v296
        %v896 = vunpack.c.l.b16 %v297
        %v897 = vunpack.c.l.b16 %v298
        %v898 = vunpack.c.l.b16 %v299
        %v899 = vunpack.c.l.b16 %v300
        %v900 = vunpack.c.l.b16 %v301
        %v901 = vunpack.c.l.b16 %v302
        %v902 = vunpack.c.l.b16 %v303
        %v903 = vunpack.c.l.b16 %v304
        %v904 = vunpack.c.l.b16 %v305
        %v905 = vunpack.c.l.b16 %v306
        %v906 = vunpack.c.l.b16 %v307
        %v907 = vunpack.c.l.b16 %v308
        %v908 = vunpack.c.l.b16 %v309
        %v909 = vunpack.c.l.b16 %v310
        %v910 = vunpack.c.l.b16 %v311
        %v911 = vunpack.c.l.b16 %v312
        %v912 = vunpack.c.l.b16 %v313
        %v913 = vunpack.c.l.b16 %v314
        %v914 = vunpack.c.l.b16 %v315
        %v915 = vunpack.c.l.b16 %v316
        %v916 = vunpack.c.l.b16 %v317
        %v917 = vunpack.c.l.b16 %v318
        %v918 = vunpack.c.l.b16 %v319
        %v919 = vunpack.c.l.b16 %v320
        %v920 = vunpack.c.l.b16 %v321
        %v921 = vunpack.c.l.b16 %v322
        %v922 = vunpack.c.l.b16 %v323
        %v923 = vunpack.c.l.b16 %v324
        %v924 = vunpack.c.l.b16 %v325
        %v925 = vunpack.c.l.b16 %v326
        %v926 = vunpack.c.l.b16 %v327
        %v927 = vunpack.c.l.b16 %v328
        %v928 = vunpack.c.l.b16 %v329
        %v929 = vunpack.c.l.b16 %v330
        %v930 = vunpack.c.l.b16 %v331
        %v931 = vunpack.c.l.b16 %v332
        %v932 = vunpack.c.l.b16 %v333
        %v933 = vunpack.c.l.b16 %v334
        %v934 = vunpack.c.l.b16 %v335
        %v935 = vunpack.c.l.b16 %v336
        %v936 = vunpack.c.l.b16 %v337
        %v937 = vunpack.c.l.b16 %v338
        %v938 = vunpack.c.l.b16 %v339
        %v939 = vunpack.c.l.b16 %v340
        %v940 = vunpack.c.l.b16 %v341
        %v941 = vunpack.c.l.b16 %v342
        %v942 = vunpack.c.l.b16 %v343
        %v943 = vunpack.c.l.b16 %v344
        %v944 = vunpack.c.l.b16 %v345
        %v945 = vunpack.c.l.b16 %v346
        %v946 = vunpack.c.l.b16 %v347
        %v947 = vunpack.c.l.b16 %v348
        %v948 = vunpack.c.l.b16 %v349
        %v949 = vunpack.c.l.b16 %v350
        %v950 = vunpack.c.l.b16 %v351
        %v951 = vunpack.c.l.b16 %v352
        %v952 = vunpack.c.l.b16 %v353
        %v953 = vunpack.c.l.b16 %v354
        %v954 = vunpack.c.l.b16 %v355
        %v955 = vunpack.c.l.b16 %v356
        %v956 = vunpack.c.l.b16 %v357
        %v957 = vunpack.c.l.b16 %v358
        %v958 = vunpack.c.l.b16 %v359
        %v959 = vunpack.c.l.b16 %v360
        %v960 = vunpack.c.l.b16 %v361
        %v961 = vunpack.c.l.b16 %v362
        %v962 = vunpack.c.l.b16 %v363
        %v963 = vunpack.c.l.b16 %v364
        %v964 = vunpack.c.l.b16 %v365
        %v965 = vunpack.c.l.b16 %v366
        %v966 = vunpack.c.l.b16 %v367
        %v967 = vunpack.c.l.b16 %v368
        %v968 = vunpack.c.l.b16 %v369
        %v969 = vunpack.c.l.b16 %v370
        %v970 = vunpack.c.l.b16 %v371
        %v971 = vunpack.c.l.b16 %v372
        %v972 = vunpack.c.l.b16 %v373
        %v973 = vunpack.c.l.b16 %v374
        %v974 = vunpack.c.l.b16 %v375
        %v975 = vunpack.c.l.b16 %v376
        %v976 = vunpack.c.l.b16 %v377
        %v977 = vunpack.c.l.b16 %v378
        %v978 = vunpack.c.l.b16 %v379
        %v979 = vunpack.c.l.b16 %v380
        %v980 = vunpack.c.l.b16 %v381
        %v981 = vunpack.c.l.b16 %v382
        %v982 = vunpack.c.l.b16 %v383
        %v983 = vunpack.c.l.b16 %v384
        %v984 = vunpack.c.l.b16 %v385
        %v985 = vunpack.c.l.b16 %v386
        %v986 = vunpack.c.l.b16 %v387
        %v987 = vunpack.c.l.b16 %v388
        %v988 = vunpack.c.l.b16 %v389
        %v989 = vunpack.c.l.b16 %v390
        %v990 = vunpack.c.l.b16 %v391
        %v991 = vunpack.c.l.b16 %v392
        %v992 = vunpack.c.l.b16 %v393
        %v993 = vunpack.c.l.b16 %v394
        %v994 = vunpack.c.l.b16 %v395
        %v995 = vunpack.c.l.b16 %v396
        %v996 = vunpack.c.l.b16 %v397
        %v997 = vunpack.c.l.b16 %v398
        %v998 = vunpack.c.l.b16 %v399
        %v999 = vunpack.c.l.b16 %v400
        %v1000 = vunpack.c.l.b16 %v401
        %v1001 = vunpack.c.l.b16 %v402
        %v1002 = vunpack.c.l.b16 %v403
        %v1003 = vunpack.c.l.b16 %v404
        %v1004 = vunpack.c.l.b16 %v405
        %v1005 = vunpack.c.l.b16 %v406
        %v1006 = vunpack.c.l.b16 %v407
        %v1007 = vunpack.c.l.b16 %v408
        %v1008 = vunpack.c.l.b16 %v409
        %v1009 = vunpack.c.l.b16 %v410
        %v1010 = vunpack.c.l.b16 %v411
        %v1011 = vunpack.c.l.b16 %v412
        %v1012 = vunpack.c.l.b16 %v413
        %v1013 = vunpack.c.l.b16 %v414
        %v1014 = vunpack.c.l.b16 %v415
        %v1015 = vunpack.c.l.b16 %v416
        %v1016 = vunpack.c.l.b16 %v417
        %v1017 = vunpack.c.l.b16 %v418
        %v1018 = vunpack.c.l.b16 %v419
        %v1019 = vunpack.c.l.b16 %v420
        %v1020 = vunpack.c.l.b16 %v421
        %v1021 = vunpack.c.l.b16 %v422
        %v1022 = vunpack.c.l.b16 %v423
        %v1023 = vunpack.c.l.b16 %v424
        %v1024 = vunpack.c.l.b16 %v425
        %v1025 = vunpack.c.l.b16 %v426
        %v1026 = vunpack.c.l.b16 %v427
        %v1027 = vunpack.c.l.b16 %v428
        %v1028 = vunpack.c.l.b16 %v429
        %v1029 = vunpack.c.l.b16 %v430
        %v1030 = vunpack.c.l.b16 %v431
        %v1031 = vunpack.c.l.b16 %v432
        %v1032 = vunpack.c.l.b16 %v433
        %v1033 = vunpack.c.l.b16 %v434
        %v1034 = vunpack.c.l.b16 %v435
        %v1035 = vunpack.c.l.b16 %v436
        %v1036 = vunpack.c.l.b16 %v437
        %v1037 = vunpack.c.l.b16 %v438
        %v1038 = vunpack.c.l.b16 %v439
        %v1039 = vunpack.c.l.b16 %v440
        %v1040 = vunpack.c.l.b16 %v441
        %v1041 = vunpack.c.l.b16 %v442
        %v1042 = vunpack.c.l.b16 %v443
        %v1043 = vunpack.c.l.b16 %v444
        %v1044 = vunpack.c.l.b16 %v445
        %v1045 = vunpack.c.l.b16 %v446
        %v1046 = vunpack.c.l.b16 %v447
        %v1047 = vunpack.c.l.b16 %v448
        %v1048 = vunpack.c.l.b16 %v449
        %v1049 = vunpack.c.l.b16 %v450
        %v1050 = vunpack.c.l.b16 %v451
        %v1051 = vunpack.c.l.b16 %v452
        %v1052 = vunpack.c.l.b16 %v453
        %v1053 = vunpack.c.l.b16 %v454
        %v1054 = vunpack.c.l.b16 %v455
        %v1055 = vunpack.c.l.b16 %v456
        %v1056 = vunpack.c.l.b16 %v457
        %v1057 = vunpack.c.l.b16 %v458
        %v1058 = vunpack.c.l.b16 %v459
        %v1059 = vunpack.c.l.b16 %v460
        %v1060 = vunpack.c.l.b16 %v461
        %v1061 = vunpack.c.l.b16 %v462
        %v1062 = vunpack.c.l.b16 %v463
        %v1063 = vunpack.c.l.b16 %v464
        %v1064 = vunpack.c.l.b16 %v465
        %v1065 = vunpack.c.l.b16 %v466
        %v1066 = vunpack.c.l.b16 %v467
        %v1067 = vunpack.c.l.b16 %v468
        %v1068 = vunpack.c.l.b16 %v469
        %v1069 = vunpack.c.l.b16 %v470
        %v1070 = vunpack.c.l.b16 %v471
        %v1071 = vunpack.c.l.b16 %v472
        %v1072 = vunpack.c.l.b16 %v473
        %v1073 = vunpack.c.l.b16 %v474
        %v1074 = vunpack.c.l.b16 %v475
        %v1075 = vunpack.c.l.b16 %v476
        %v1076 = vunpack.c.l.b16 %v477
        %v1077 = vunpack.c.l.b16 %v478
        %v1078 = vunpack.c.l.b16 %v479
        %v1079 = vunpack.c.l.b16 %v480
        %v1080 = vunpack.c.l.b16 %v481
        %v1081 = vunpack.c.l.b16 %v482
        %v1082 = vunpack.c.l.b16 %v483
        %v1083 = vunpack.c.l.b16 %v484
        %v1084 = vunpack.c.l.b16 %v485
        %v1085 = vunpack.c.l.b16 %v486
        %v1086 = vunpack.c.l.b16 %v487
        %v1087 = vunpack.c.l.b16 %v488
        %v1088 = vunpack.c.l.b16 %v489
        %v1089 = vunpack.c.l.b16 %v490
        %v1090 = vunpack.c.l.b16 %v491
        %v1091 = vunpack.c.l.b16 %v492
        %v1092 = vunpack.c.l.b16 %v493
        %v1093 = vunpack.c.l.b16 %v494
        %v1094 = vunpack.c.l.b16 %v495
        %v1095 = vpack.c.b16 %v840, %v839
        %v1096 = vpack.c.b16 %v842, %v841
        %v1097 = vpack.c.b16 %v844, %v843
        %v1098 = vpack.c.b16 %v846, %v845
        %v1099 = vpack.c.b16 %v848, %v847
        %v1100 = vpack.c.b16 %v850, %v849
        %v1101 = vpack.c.b16 %v852, %v851
        %v1102 = vpack.c.b16 %v854, %v853
        %v1103 = vpack.c.b16 %v856, %v855
        %v1104 = vpack.c.b16 %v858, %v857
        %v1105 = vpack.c.b16 %v860, %v859
        %v1106 = vpack.c.b16 %v862, %v861
        %v1107 = vpack.c.b16 %v864, %v863
        %v1108 = vpack.c.b16 %v866, %v865
        %v1109 = vpack.c.b16 %v868, %v867
        %v1110 = vpack.c.b16 %v870, %v869
        %v1111 = vpack.c.b16 %v872, %v871
        %v1112 = vpack.c.b16 %v874, %v873
        %v1113 = vpack.c.b16 %v876, %v875
        %v1114 = vpack.c.b16 %v878, %v877
        %v1115 = vpack.c.b16 %v880, %v879
        %v1116 = vpack.c.b16 %v882, %v881
        %v1117 = vpack.c.b16 %v884, %v883
        %v1118 = vpack.c.b16 %v886, %v885
        %v1119 = vpack.c.b16 %v888, %v887
        %v1120 = vpack.c.b16 %v890, %v889
        %v1121 = vpack.c.b16 %v892, %v891
        %v1122 = vpack.c.b16 %v894, %v893
        %v1123 = vpack.c.b16 %v896, %v895
        %v1124 = vpack.c.b16 %v898, %v897
        %v1125 = vpack.c.b16 %v900, %v899
        %v1126 = vpack.c.b16 %v902, %v901
        %v1127 = vpack.c.b16 %v904, %v903
        %v1128 = vpack.c.b16 %v906, %v905
        %v1129 = vpack.c.b16 %v908, %v907
        %v1130 = vpack.c.b16 %v910, %v909
        %v1131 = vpack.c.b16 %v912, %v911
        %v1132 = vpack.c.b16 %v914, %v913
        %v1133 = vpack.c.b16 %v916, %v915
        %v1134 = vpack.c.b16 %v918, %v917
        %v1135 = vpack.c.b16 %v920, %v919
        %v1136 = vpack.c.b16 %v922, %v921
        %v1137 = vpack.c.b16 %v924, %v923
        %v1138 = vpack.c.b16 %v926, %v925
        %v1139 = vpack.c.b16 %v928, %v927
        %v1140 = vpack.c.b16 %v930, %v929
        %v1141 = vpack.c.b16 %v932, %v931
        %v1142 = vpack.c.b16 %v934, %v933
        %v1143 = vpack.c.b16 %v936, %v935
        %v1144 = vpack.c.b16 %v938, %v937
        %v1145 = vpack.c.b16 %v940, %v939
        %v1146 = vpack.c.b16 %v942, %v941
        %v1147 = vpack.c.b16 %v944, %v943
        %v1148 = vpack.c.b16 %v946, %v945
        %v1149 = vpack.c.b16 %v948, %v947
        %v1150 = vpack.c.b16 %v950, %v949
        %v1151 = vpack.c.b16 %v952, %v951
        %v1152 = vpack.c.b16 %v954, %v953
        %v1153 = vpack.c.b16 %v956, %v955
        %v1154 = vpack.c.b16 %v958, %v957
        %v1155 = vpack.c.b16 %v960, %v959
        %v1156 = vpack.c.b16 %v962, %v961
        %v1157 = vpack.c.b16 %v964, %v963
        %v1158 = vpack.c.b16 %v966, %v965
        %v1159 = vpack.c.b16 %v968, %v967
        %v1160 = vpack.c.b16 %v970, %v969
        %v1161 = vpack.c.b16 %v972, %v971
        %v1162 = vpack.c.b16 %v974, %v973
        %v1163 = vpack.c.b16 %v976, %v975
        %v1164 = vpack.c.b16 %v978, %v977
        %v1165 = vpack.c.b16 %v980, %v979
        %v1166 = vpack.c.b16 %v982, %v981
        %v1167 = vpack.c.b16 %v984, %v983
        %v1168 = vpack.c.b16 %v986, %v985
        %v1169 = vpack.c.b16 %v988, %v987
        %v1170 = vpack.c.b16 %v990, %v989
        %v1171 = vpack.c.b16 %v992, %v991
        %v1172 = vpack.c.b16 %v994, %v993
        %v1173 = vpack.c.b16 %v996, %v995
        %v1174 = vpack.c.b16 %v998, %v997
        %v1175 = vpack.c.b16 %v1000, %v999
        %v1176 = vpack.c.b16 %v1002, %v1001
        %v1177 = vpack.c.b16 %v1004, %v1003
        %v1178 = vpack.c.b16 %v1006, %v1005
        %v1179 = vpack.c.b16 %v1008, %v1007
        %v1180 = vpack.c.b16 %v1010, %v1009
        %v1181 = vpack.c.b16 %v1012, %v1011
        %v1182 = vpack.c.b16 %v1014, %v1013
        %v1183 = vpack.c.b16 %v1016, %v1015
        %v1184 = vpack.c.b16 %v1018, %v1017
        %v1185 = vpack.c.b16 %v1020, %v1019
        %v1186 = vpack.c.b16 %v1022, %v1021
        %v1187 = vpack.c.b16 %v1024, %v1023
        %v1188 = vpack.c.b16 %v1026, %v1025
        %v1189 = vpack.c.b16 %v1028, %v1027
        %v1190 = vpack.c.b16 %v1030, %v1029
        %v1191 = vpack.c.b16 %v1032, %v1031
        %v1192 = vpack.c.b16 %v1034, %v1033
        %v1193 = vpack.c.b16 %v1036, %v1035
        %v1194 = vpack.c.b16 %v1038, %v1037
        %v1195 = vpack.c.b16 %v1040, %v1039
        %v1196 = vpack.c.b16 %v1042, %v1041
        %v1197 = vpack.c.b16 %v1044, %v1043
        %v1198 = vpack.c.b16 %v1046, %v1045
        %v1199 = vpack.c.b16 %v1048, %v1047
        %v1200 = vpack.c.b16 %v1050, %v1049
        %v1201 = vpack.c.b16 %v1052, %v1051
        %v1202 = vpack.c.b16 %v1054, %v1053
        %v1203 = vpack.c.b16 %v1056, %v1055
        %v1204 = vpack.c.b16 %v1058, %v1057
        %v1205 = vpack.c.b16 %v1060, %v1059
        %v1206 = vpack.c.b16 %v1062, %v1061
        %v1207 = vpack.c.b16 %v1064, %v1063
        %v1208 = vpack.c.b16 %v1066, %v1065
        %v1209 = vpack.c.b16 %v1068, %v1067
        %v1210 = vpack.c.b16 %v1070, %v1069
        %v1211 = vpack.c.b16 %v1072, %v1071
        %v1212 = vpack.c.b16 %v1074, %v1073
        %v1213 = vpack.c.b16 %v1076, %v1075
        %v1214 = vpack.c.b16 %v1078, %v1077
        %v1215 = vpack.c.b16 %v1080, %v1079
        %v1216 = vpack.c.b16 %v1082, %v1081
        %v1217 = vpack.c.b16 %v1084, %v1083
        %v1218 = vpack.c.b16 %v1086, %v1085
        %v1219 = vpack.c.b16 %v1088, %v1087
        %v1220 = vpack.c.b16 %v1090, %v1089
        %v1221 = vpack.c.b16 %v1092, %v1091
        %v1222 = vpack.c.b16 %v1094, %v1093
        %1351 = vmatprep.subr.bf16.mxu0 0
        %1352 = vmatpush1.bf16.msra.mxu0 %v1102
        %1353 = vmatprep.subr.bf16.mxu0 0
        %1354 = vmatpush1.bf16.msra.mxu0 %v1101
        %1355 = vmatprep.subr.bf16.mxu0 0
        %1356 = vmatpush1.bf16.msra.mxu0 %v1100
        %1357 = vmatprep.subr.bf16.mxu0 0
        %1358 = vmatpush1.bf16.msra.mxu0 %v1099
        %1359 = vmatprep.subr.bf16.mxu0 0
        %1360 = vmatpush1.bf16.msra.mxu0 %v1098
        %1361 = vmatprep.subr.bf16.mxu0 0
        %1362 = vmatpush1.bf16.msra.mxu0 %v1097
        %1363 = vmatprep.subr.bf16.mxu0 0
        %1364 = vmatpush1.bf16.msra.mxu0 %v1096
        %1365 = vmatprep.subr.bf16.mxu0 0
        %1366 = vmatpush1.bf16.msra.mxu0 %v1095
        %1367 = vmatprep.subr.bf16.mxu0 0
        %1368 = vmatpush2.bf16.msra.mxu0 %v1110
        %1369 = vmatprep.subr.bf16.mxu0 0
        %1370 = vmatpush2.bf16.msra.mxu0 %v1109
        %1371 = vmatprep.subr.bf16.mxu0 0
        %1372 = vmatpush2.bf16.msra.mxu0 %v1108
        %1373 = vmatprep.subr.bf16.mxu0 0
        %1374 = vmatpush2.bf16.msra.mxu0 %v1107
        %1375 = vmatprep.subr.bf16.mxu0 0
        %1376 = vmatpush2.bf16.msra.mxu0 %v1106
        %1377 = vmatprep.subr.bf16.mxu0 0
        %1378 = vmatpush2.bf16.msra.mxu0 %v1105
        %1379 = vmatprep.subr.bf16.mxu0 0
        %1380 = vmatpush2.bf16.msra.mxu0 %v1104
        %1381 = vmatprep.subr.bf16.mxu0 0
        %1382 = vmatpush2.bf16.msra.mxu0 %v1103
        %1383 = vmatprep.mubr.bf16.mxu0 %v552
        %1384 = vmatmul.mubr.bf16.gmra.mxu0 %v551
        %v1385 = vpop.f32.mrf.mxu0
        %v1386 = vadd.f32 %v501, %v1385
        %v1387 = vpop.f32.mrf.mxu0
        %v1388 = vpop.f32.mrf.mxu0
        %v1389 = vadd.f32 %v501, %v1388
        %v1390 = vpop.f32.mrf.mxu0
        %1391 = vdwg.mxu0
        %1392 = vmatprep.subr.bf16.mxu0 0
        %1393 = vmatpush1.bf16.msra.mxu0 %v1118
        %1394 = vmatprep.subr.bf16.mxu0 0
        %1395 = vmatpush1.bf16.msra.mxu0 %v1117
        %1396 = vmatprep.subr.bf16.mxu0 0
        %1397 = vmatpush1.bf16.msra.mxu0 %v1116
        %1398 = vmatprep.subr.bf16.mxu0 0
        %1399 = vmatpush1.bf16.msra.mxu0 %v1115
        %1400 = vmatprep.subr.bf16.mxu0 0
        %1401 = vmatpush1.bf16.msra.mxu0 %v1114
        %1402 = vmatprep.subr.bf16.mxu0 0
        %1403 = vmatpush1.bf16.msra.mxu0 %v1113
        %1404 = vmatprep.subr.bf16.mxu0 0
        %1405 = vmatpush1.bf16.msra.mxu0 %v1112
        %1406 = vmatprep.subr.bf16.mxu0 0
        %1407 = vmatpush1.bf16.msra.mxu0 %v1111
        %1408 = vmatprep.subr.bf16.mxu0 0
        %1409 = vmatpush2.bf16.msra.mxu0 %v1126
        %1410 = vmatprep.subr.bf16.mxu0 0
        %1411 = vmatpush2.bf16.msra.mxu0 %v1125
        %1412 = vmatprep.subr.bf16.mxu0 0
        %1413 = vmatpush2.bf16.msra.mxu0 %v1124
        %1414 = vmatprep.subr.bf16.mxu0 0
        %1415 = vmatpush2.bf16.msra.mxu0 %v1123
        %1416 = vmatprep.subr.bf16.mxu0 0
        %1417 = vmatpush2.bf16.msra.mxu0 %v1122
        %1418 = vmatprep.subr.bf16.mxu0 0
        %1419 = vmatpush2.bf16.msra.mxu0 %v1121
        %1420 = vmatprep.subr.bf16.mxu0 0
        %1421 = vmatpush2.bf16.msra.mxu0 %v1120
        %1422 = vmatprep.subr.bf16.mxu0 0
        %1423 = vmatpush2.bf16.msra.mxu0 %v1119
        %1424 = vmatprep.mubr.bf16.mxu0 %v554
        %1425 = vmatmul.mubr.bf16.gmra.mxu0 %v553
        %v1426 = vpop.f32.mrf.mxu0
        %v1427 = vadd.f32 %v1386, %v1426
        %v1428 = vpop.f32.mrf.mxu0
        %v1429 = vpop.f32.mrf.mxu0
        %v1430 = vadd.f32 %v1389, %v1429
        %v1431 = vpop.f32.mrf.mxu0
        %1432 = vdwg.mxu0
        %1433 = vmatprep.subr.bf16.mxu0 0
        %1434 = vmatpush1.bf16.msra.mxu0 %v1134
        %1435 = vmatprep.subr.bf16.mxu0 0
        %1436 = vmatpush1.bf16.msra.mxu0 %v1133
        %1437 = vmatprep.subr.bf16.mxu0 0
        %1438 = vmatpush1.bf16.msra.mxu0 %v1132
        %1439 = vmatprep.subr.bf16.mxu0 0
        %1440 = vmatpush1.bf16.msra.mxu0 %v1131
        %1441 = vmatprep.subr.bf16.mxu0 0
        %1442 = vmatpush1.bf16.msra.mxu0 %v1130
        %1443 = vmatprep.subr.bf16.mxu0 0
        %1444 = vmatpush1.bf16.msra.mxu0 %v1129
        %1445 = vmatprep.subr.bf16.mxu0 0
        %1446 = vmatpush1.bf16.msra.mxu0 %v1128
        %1447 = vmatprep.subr.bf16.mxu0 0
        %1448 = vmatpush1.bf16.msra.mxu0 %v1127
        %1449 = vmatprep.subr.bf16.mxu0 0
        %1450 = vmatpush2.bf16.msra.mxu0 %v1142
        %1451 = vmatprep.subr.bf16.mxu0 0
        %1452 = vmatpush2.bf16.msra.mxu0 %v1141
        %1453 = vmatprep.subr.bf16.mxu0 0
        %1454 = vmatpush2.bf16.msra.mxu0 %v1140
        %1455 = vmatprep.subr.bf16.mxu0 0
        %1456 = vmatpush2.bf16.msra.mxu0 %v1139
        %1457 = vmatprep.subr.bf16.mxu0 0
        %1458 = vmatpush2.bf16.msra.mxu0 %v1138
        %1459 = vmatprep.subr.bf16.mxu0 0
        %1460 = vmatpush2.bf16.msra.mxu0 %v1137
        %1461 = vmatprep.subr.bf16.mxu0 0
        %1462 = vmatpush2.bf16.msra.mxu0 %v1136
        %1463 = vmatprep.subr.bf16.mxu0 0
        %1464 = vmatpush2.bf16.msra.mxu0 %v1135
        %1465 = vmatprep.mubr.bf16.mxu0 %v556
        %1466 = vmatmul.mubr.bf16.gmra.mxu0 %v555
        %v1467 = vpop.f32.mrf.mxu0
        %v1468 = vadd.f32 %v1427, %v1467
        %v1469 = vpop.f32.mrf.mxu0
        %v1470 = vpop.f32.mrf.mxu0
        %v1471 = vadd.f32 %v1430, %v1470
        %v1472 = vpop.f32.mrf.mxu0
        %1473 = vdwg.mxu0
        %1474 = vmatprep.subr.bf16.mxu0 0
        %1475 = vmatpush1.bf16.msra.mxu0 %v1150
        %1476 = vmatprep.subr.bf16.mxu0 0
        %1477 = vmatpush1.bf16.msra.mxu0 %v1149
        %1478 = vmatprep.subr.bf16.mxu0 0
        %1479 = vmatpush1.bf16.msra.mxu0 %v1148
        %1480 = vmatprep.subr.bf16.mxu0 0
        %1481 = vmatpush1.bf16.msra.mxu0 %v1147
        %1482 = vmatprep.subr.bf16.mxu0 0
        %1483 = vmatpush1.bf16.msra.mxu0 %v1146
        %1484 = vmatprep.subr.bf16.mxu0 0
        %1485 = vmatpush1.bf16.msra.mxu0 %v1145
        %1486 = vmatprep.subr.bf16.mxu0 0
        %1487 = vmatpush1.bf16.msra.mxu0 %v1144
        %1488 = vmatprep.subr.bf16.mxu0 0
        %1489 = vmatpush1.bf16.msra.mxu0 %v1143
        %1490 = vmatprep.subr.bf16.mxu0 0
        %1491 = vmatpush2.bf16.msra.mxu0 %v1158
        %1492 = vmatprep.subr.bf16.mxu0 0
        %1493 = vmatpush2.bf16.msra.mxu0 %v1157
        %1494 = vmatprep.subr.bf16.mxu0 0
        %1495 = vmatpush2.bf16.msra.mxu0 %v1156
        %1496 = vmatprep.subr.bf16.mxu0 0
        %1497 = vmatpush2.bf16.msra.mxu0 %v1155
        %1498 = vmatprep.subr.bf16.mxu0 0
        %1499 = vmatpush2.bf16.msra.mxu0 %v1154
        %1500 = vmatprep.subr.bf16.mxu0 0
        %1501 = vmatpush2.bf16.msra.mxu0 %v1153
        %1502 = vmatprep.subr.bf16.mxu0 0
        %1503 = vmatpush2.bf16.msra.mxu0 %v1152
        %1504 = vmatprep.subr.bf16.mxu0 0
        %1505 = vmatpush2.bf16.msra.mxu0 %v1151
        %1506 = vmatprep.mubr.bf16.mxu0 %v558
        %1507 = vmatmul.mubr.bf16.gmra.mxu0 %v557
        %v1508 = vpop.f32.mrf.mxu0
        %v1509 = vadd.f32 %v1468, %v1508
        %v1510 = vpop.f32.mrf.mxu0
        %v1511 = vpop.f32.mrf.mxu0
        %v1512 = vadd.f32 %v1471, %v1511
        %v1513 = vpop.f32.mrf.mxu0
        %1514 = vdwg.mxu0
        %1515 = vmatprep.subr.bf16.mxu0 0
        %1516 = vmatpush1.bf16.msra.mxu0 %v1166
        %1517 = vmatprep.subr.bf16.mxu0 0
        %1518 = vmatpush1.bf16.msra.mxu0 %v1165
        %1519 = vmatprep.subr.bf16.mxu0 0
        %1520 = vmatpush1.bf16.msra.mxu0 %v1164
        %1521 = vmatprep.subr.bf16.mxu0 0
        %1522 = vmatpush1.bf16.msra.mxu0 %v1163
        %1523 = vmatprep.subr.bf16.mxu0 0
        %1524 = vmatpush1.bf16.msra.mxu0 %v1162
        %1525 = vmatprep.subr.bf16.mxu0 0
        %1526 = vmatpush1.bf16.msra.mxu0 %v1161
        %1527 = vmatprep.subr.bf16.mxu0 0
        %1528 = vmatpush1.bf16.msra.mxu0 %v1160
        %1529 = vmatprep.subr.bf16.mxu0 0
        %1530 = vmatpush1.bf16.msra.mxu0 %v1159
        %1531 = vmatprep.subr.bf16.mxu0 0
        %1532 = vmatpush2.bf16.msra.mxu0 %v1174
        %1533 = vmatprep.subr.bf16.mxu0 0
        %1534 = vmatpush2.bf16.msra.mxu0 %v1173
        %1535 = vmatprep.subr.bf16.mxu0 0
        %1536 = vmatpush2.bf16.msra.mxu0 %v1172
        %1537 = vmatprep.subr.bf16.mxu0 0
        %1538 = vmatpush2.bf16.msra.mxu0 %v1171
        %1539 = vmatprep.subr.bf16.mxu0 0
        %1540 = vmatpush2.bf16.msra.mxu0 %v1170
        %1541 = vmatprep.subr.bf16.mxu0 0
        %1542 = vmatpush2.bf16.msra.mxu0 %v1169
        %1543 = vmatprep.subr.bf16.mxu0 0
        %1544 = vmatpush2.bf16.msra.mxu0 %v1168
        %1545 = vmatprep.subr.bf16.mxu0 0
        %1546 = vmatpush2.bf16.msra.mxu0 %v1167
        %1547 = vmatprep.mubr.bf16.mxu0 %v560
        %1548 = vmatmul.mubr.bf16.gmra.mxu0 %v559
        %v1549 = vpop.f32.mrf.mxu0
        %v1550 = vadd.f32 %v1509, %v1549
        %v1551 = vpop.f32.mrf.mxu0
        %v1552 = vpop.f32.mrf.mxu0
        %v1553 = vadd.f32 %v1512, %v1552
        %v1554 = vpop.f32.mrf.mxu0
        %1555 = vdwg.mxu0
        %1556 = vmatprep.subr.bf16.mxu0 0
        %1557 = vmatpush1.bf16.msra.mxu0 %v1182
        %1558 = vmatprep.subr.bf16.mxu0 0
        %1559 = vmatpush1.bf16.msra.mxu0 %v1181
        %1560 = vmatprep.subr.bf16.mxu0 0
        %1561 = vmatpush1.bf16.msra.mxu0 %v1180
        %1562 = vmatprep.subr.bf16.mxu0 0
        %1563 = vmatpush1.bf16.msra.mxu0 %v1179
        %1564 = vmatprep.subr.bf16.mxu0 0
        %1565 = vmatpush1.bf16.msra.mxu0 %v1178
        %1566 = vmatprep.subr.bf16.mxu0 0
        %1567 = vmatpush1.bf16.msra.mxu0 %v1177
        %1568 = vmatprep.subr.bf16.mxu0 0
        %1569 = vmatpush1.bf16.msra.mxu0 %v1176
        %1570 = vmatprep.subr.bf16.mxu0 0
        %1571 = vmatpush1.bf16.msra.mxu0 %v1175
        %1572 = vmatprep.subr.bf16.mxu0 0
        %1573 = vmatpush2.bf16.msra.mxu0 %v1190
        %1574 = vmatprep.subr.bf16.mxu0 0
        %1575 = vmatpush2.bf16.msra.mxu0 %v1189
        %1576 = vmatprep.subr.bf16.mxu0 0
        %1577 = vmatpush2.bf16.msra.mxu0 %v1188
        %1578 = vmatprep.subr.bf16.mxu0 0
        %1579 = vmatpush2.bf16.msra.mxu0 %v1187
        %1580 = vmatprep.subr.bf16.mxu0 0
        %1581 = vmatpush2.bf16.msra.mxu0 %v1186
        %1582 = vmatprep.subr.bf16.mxu0 0
        %1583 = vmatpush2.bf16.msra.mxu0 %v1185
        %1584 = vmatprep.subr.bf16.mxu0 0
        %1585 = vmatpush2.bf16.msra.mxu0 %v1184
        %1586 = vmatprep.subr.bf16.mxu0 0
        %1587 = vmatpush2.bf16.msra.mxu0 %v1183
        %1588 = vmatprep.mubr.bf16.mxu0 %v562
        %1589 = vmatmul.mubr.bf16.gmra.mxu0 %v561
        %v1590 = vpop.f32.mrf.mxu0
        %v1591 = vadd.f32 %v1550, %v1590
        %v1592 = vpop.f32.mrf.mxu0
        %v1593 = vpop.f32.mrf.mxu0
        %v1594 = vadd.f32 %v1553, %v1593
        %v1595 = vpop.f32.mrf.mxu0
        %1596 = vdwg.mxu0
        %1597 = vmatprep.subr.bf16.mxu0 0
        %1598 = vmatpush1.bf16.msra.mxu0 %v1198
        %1599 = vmatprep.subr.bf16.mxu0 0
        %1600 = vmatpush1.bf16.msra.mxu0 %v1197
        %1601 = vmatprep.subr.bf16.mxu0 0
        %1602 = vmatpush1.bf16.msra.mxu0 %v1196
        %1603 = vmatprep.subr.bf16.mxu0 0
        %1604 = vmatpush1.bf16.msra.mxu0 %v1195
        %1605 = vmatprep.subr.bf16.mxu0 0
        %1606 = vmatpush1.bf16.msra.mxu0 %v1194
        %1607 = vmatprep.subr.bf16.mxu0 0
        %1608 = vmatpush1.bf16.msra.mxu0 %v1193
        %1609 = vmatprep.subr.bf16.mxu0 0
        %1610 = vmatpush1.bf16.msra.mxu0 %v1192
        %1611 = vmatprep.subr.bf16.mxu0 0
        %1612 = vmatpush1.bf16.msra.mxu0 %v1191
        %1613 = vmatprep.subr.bf16.mxu0 0
        %1614 = vmatpush2.bf16.msra.mxu0 %v1206
        %1615 = vmatprep.subr.bf16.mxu0 0
        %1616 = vmatpush2.bf16.msra.mxu0 %v1205
        %1617 = vmatprep.subr.bf16.mxu0 0
        %1618 = vmatpush2.bf16.msra.mxu0 %v1204
        %1619 = vmatprep.subr.bf16.mxu0 0
        %1620 = vmatpush2.bf16.msra.mxu0 %v1203
        %1621 = vmatprep.subr.bf16.mxu0 0
        %1622 = vmatpush2.bf16.msra.mxu0 %v1202
        %1623 = vmatprep.subr.bf16.mxu0 0
        %1624 = vmatpush2.bf16.msra.mxu0 %v1201
        %1625 = vmatprep.subr.bf16.mxu0 0
        %1626 = vmatpush2.bf16.msra.mxu0 %v1200
        %1627 = vmatprep.subr.bf16.mxu0 0
        %1628 = vmatpush2.bf16.msra.mxu0 %v1199
        %1629 = vmatprep.mubr.bf16.mxu0 %v564
        %1630 = vmatmul.mubr.bf16.gmra.mxu0 %v563
        %v1631 = vpop.f32.mrf.mxu0
        %v1632 = vadd.f32 %v1591, %v1631
        %v1633 = vpop.f32.mrf.mxu0
        %v1634 = vpop.f32.mrf.mxu0
        %v1635 = vadd.f32 %v1594, %v1634
        %v1636 = vpop.f32.mrf.mxu0
        %1637 = vdwg.mxu0
        %1638 = vmatprep.subr.bf16.mxu0 0
        %1639 = vmatpush1.bf16.msra.mxu0 %v1214
        %1640 = vmatprep.subr.bf16.mxu0 0
        %1641 = vmatpush1.bf16.msra.mxu0 %v1213
        %1642 = vmatprep.subr.bf16.mxu0 0
        %1643 = vmatpush1.bf16.msra.mxu0 %v1212
        %1644 = vmatprep.subr.bf16.mxu0 0
        %1645 = vmatpush1.bf16.msra.mxu0 %v1211
        %1646 = vmatprep.subr.bf16.mxu0 0
        %1647 = vmatpush1.bf16.msra.mxu0 %v1210
        %1648 = vmatprep.subr.bf16.mxu0 0
        %1649 = vmatpush1.bf16.msra.mxu0 %v1209
        %1650 = vmatprep.subr.bf16.mxu0 0
        %1651 = vmatpush1.bf16.msra.mxu0 %v1208
        %1652 = vmatprep.subr.bf16.mxu0 0
        %1653 = vmatpush1.bf16.msra.mxu0 %v1207
        %1654 = vmatprep.subr.bf16.mxu0 0
        %1655 = vmatpush2.bf16.msra.mxu0 %v1222
        %1656 = vmatprep.subr.bf16.mxu0 0
        %1657 = vmatpush2.bf16.msra.mxu0 %v1221
        %1658 = vmatprep.subr.bf16.mxu0 0
        %1659 = vmatpush2.bf16.msra.mxu0 %v1220
        %1660 = vmatprep.subr.bf16.mxu0 0
        %1661 = vmatpush2.bf16.msra.mxu0 %v1219
        %1662 = vmatprep.subr.bf16.mxu0 0
        %1663 = vmatpush2.bf16.msra.mxu0 %v1218
        %1664 = vmatprep.subr.bf16.mxu0 0
        %1665 = vmatpush2.bf16.msra.mxu0 %v1217
        %1666 = vmatprep.subr.bf16.mxu0 0
        %1667 = vmatpush2.bf16.msra.mxu0 %v1216
        %1668 = vmatprep.subr.bf16.mxu0 0
        %1669 = vmatpush2.bf16.msra.mxu0 %v1215
        %1670 = vmatprep.mubr.bf16.mxu0 %v566
        %1671 = vmatmul.mubr.bf16.gmra.mxu0 %v565
        %v1672 = vpop.f32.mrf.mxu0
        %v1673 = vadd.f32 %v1632, %v1672
        %v1674 = vpop.f32.mrf.mxu0
        %v1675 = vpop.f32.mrf.mxu0
        %v1676 = vadd.f32 %v1635, %v1675
        %v1677 = vpop.f32.mrf.mxu0
        %1678 = vdwg.mxu0
        %1679 = vst [vmem:[%s211] sm:$0xff] %v1673
        %1680 = vst [vmem:[%s211 + $0x8] sm:$0xff] %v1676
        %s1681 = sand.u32 %s97, 1
        %s1682 = scalar_lea.sflag [#allocation4], %s1681
        %s1683 = sand.u32 %s97, 1
        %s1684 = smul.addr %s1683, 16
        %s1685 = scalar_lea.vmem [#allocation7], %s1684
        // Predicated region
        $region41: #{tpu_custom_call.1} parent=31 // pred_check
          %p1686 = pneg %p107
        $region42: #{tpu_custom_call.1} parent=31 // pred_check_branch
          %1688 = sbr.rel (%p1686) target = $region44
        $region43: #{tpu_custom_call.1} parent=31 // pred_region
          %s1689 = smul.u32 2, %s21
          %s1690 = ssub.s32 3, %s1689
          %p1691 = scmp.lt.s32.totalorder %s1690, 2
          %s1692 = scalar_select %p1691, %s1690, 2
          %s1693 = smul.u32 128, %s1692
          %s1695 = ssub.s32 256, %s1693
          %1696 = vsyncadd %s1682, %s1695
          %p1697 = scmp.ne.s32.totalorder 0, %s1693
          %s1698 = smul.addr %s1689, 128
          %s1699 = scalar_lea.hbm %s3, %s1698
          %s1700 = smul.u32 8, %s1692
          %s1701 = sshll.u32 %s1685, 4
          %s1702 = int_to_ptr.vmem [resolvable:$true] %s1701
          %s1703 = sshll.u32 %s1700, 4
          %1707 = dma.vmem_to_hbm [thread:$0]  (%p1697), %s1702, %s1703, %s1699, %s1682, 128, 128, 8
        $region44: #{tpu_custom_call.1} parent=31 // pred_fallthru
          _
      $region32: #{tpu_custom_call.1} parent=5 // pred_fallthru
        _
      %p1708 = scmp.le.s32.totalorder 2, %s16
      // Predicated region
      $region45: #{tpu_custom_call.1} parent=5 // pred_check
        %p1709 = pneg %p1708
      $region46: #{tpu_custom_call.1} parent=5 // pred_check_branch
        %1711 = sbr.rel (%p1709) target = $region48
      $region47: #{tpu_custom_call.1} parent=5 // pred_region
        %s1712 = ssub.s32 %s16, 2
        // Predicated region
        $region49: #{tpu_custom_call.1} parent=47 // pred_check
          %p1713 = pneg %p113
        $region50: #{tpu_custom_call.1} parent=47 // pred_check_branch
          %1715 = sbr.rel (%p1713) target = $region52
        $region51: #{tpu_custom_call.1} parent=47 // pred_region
          %s1716 = sand.u32 %s98, 1
          %s1717 = scalar_lea.sflag [#allocation4], %s1716
          %s1718 = sand.u32 %s98, 1
          %s1719 = smul.addr %s1718, 16
          %s1720 = scalar_lea.vmem [#allocation7], %s1719
          %1721 = dma.done %s1717, 256
        $region52: #{tpu_custom_call.1} parent=47 // pred_fallthru
          _
      $region48: #{tpu_custom_call.1} parent=5 // pred_fallthru
        _
    $region6: #{tpu_custom_call.1} parent=1 // loop_footer
      %s20 = sadd.s32 1, %s16
    $region7: #{tpu_custom_call.1} parent=1 // loop_footer_branch
      %15 = sbr.rel target = $region3
    $region8: #{tpu_custom_call.1} parent=1 // loop_exit
      _
    %1722 = vsyncpa [#allocation3], 1
    %s1723 = scalar_lea.sflag [#allocation3], 1
    %1724 = vsyncpa %s1723, 1
    %1725 = vsyncpa [#allocation6], 1
    %1726 = vsyncpa [#allocation4], 1
    %s1727 = scalar_lea.sflag [#allocation4], 1
    %1728 = vsyncpa %s1727, 1

</llo_original>
